<compile_context>
chip_gen: v5e
topology: v5e:2x2
jax: 0.10.0
libtpu: 0.0.40
codegen_flags: <defaults>
</compile_context>

<pallas_src>
import functools

import jax
import jax.numpy as jnp
from jax.experimental import pallas as pl
from jax.experimental.pallas import tpu as pltpu

K_TAPS = 5  # CS224n-a5 CNN: Conv1d(kernel_size=5, padding=1)


def _round_up(x, m):
    return ((x + m - 1) // m) * m


def char_cnn_word_kernel(idx_ref, wfold_ref, bconv_ref, whw_ref, bhw_ref, out_ref,
                         *, mm_dtype):
    # idx_ref:   (tn, Lp)      int32 char indices (already padded with the pad token)
    # wfold_ref: (K, V, F)     conv weights with the char embedding folded in: emb @ wconv[k]
    # bconv_ref: (1, F)
    # whw_ref:   (F, 2F)       fused Highway weights  [wproj | wgate]
    # bhw_ref:   (1, 2F)       fused Highway biases   [bproj | bgate]
    # out_ref:   (tn, F_out)   F_out = F rounded up to 128 (lane-dense store)
    idx = idx_ref[...]                                   # (tn, Lp) int32
    tn, lp = idx.shape
    k_taps, v, f = wfold_ref.shape
    l_out = lp - k_taps + 1
    f_out = out_ref.shape[-1]

    # --- one-hot of every (char-position, word) pair, position-major rows ----------
    # oh[p*tn + n, c] = (idx[n, p] == c); rows for one position are a contiguous,
    # sublane-aligned block of tn rows -> conv tap shifts become aligned slices.
    iota_v = jax.lax.broadcasted_iota(jnp.int32, (tn, v), 1)
    oh_blocks = [(idx[:, p:p + 1] == iota_v).astype(mm_dtype) for p in range(lp)]
    oh = jnp.concatenate(oh_blocks, axis=0)              # (Lp*tn, V)

    # --- Conv1d(kernel=5) as K flat 2-D MXU matmuls against the folded weights -----
    acc = None
    for k in range(k_taps):
        g = jnp.dot(oh[k * tn:(k + l_out) * tn, :],
                    wfold_ref[k].astype(mm_dtype),
                    preferred_element_type=jnp.float32)  # (l_out*tn, F), f32 accum
        acc = g if acc is None else acc + g

    # --- max-pool over char positions, THEN bias + ReLU (exactly equivalent) -------
    pooled = acc[0:tn, :]
    for l in range(1, l_out):
        pooled = jnp.maximum(pooled, acc[l * tn:(l + 1) * tn, :])
    pooled = jnp.maximum(pooled + bconv_ref[...], 0.0)   # (tn, F)

    # --- Highway: one fused lane-dense matmul, then split proj/gate halves ---------
    hw_pre = jnp.dot(pooled.astype(mm_dtype), whw_ref[...].astype(mm_dtype),
                     preferred_element_type=jnp.float32) + bhw_ref[...]   # (tn, 2F)
    proj = jnp.maximum(hw_pre[:, :f], 0.0)
    gate = jax.nn.sigmoid(hw_pre[:, f:])
    word = gate * proj + (1.0 - gate) * pooled           # (tn, F)
    # TODO(synk): nn.Dropout is applied in eval mode (identity); training-mode dropout omitted.

    if f_out != f:                                       # pad to a lane-dense 128-wide slab
        word = jnp.concatenate(
            [word, jnp.zeros((tn, f_out - f), jnp.float32)], axis=-1)
    out_ref[...] = word.astype(out_ref.dtype)


def model_embeddings_forward(input_idx, params, *, pad_idx, tn=256,
                             compute_dtype=jnp.float32):
    """input_idx: (sent_len, batch, max_word_len) int32 -> (sent_len, batch, word_embed_size)."""
    sent_len, batch, max_word_len = input_idx.shape
    emb, wconv, bconv, wproj, bproj, wgate, bgate = params
    v, e = emb.shape
    k_taps, e2, f = wconv.shape
    assert k_taps == K_TAPS and e2 == e
    assert max_word_len + 2 >= K_TAPS, "word too short for kernel_size=5, padding=1"
    n = sent_len * batch

    # Enforce nn.Embedding(padding_idx=pad) semantics regardless of checkpoint contents,
    # so padding the char axis with the pad token is exactly Conv1d zero-padding.
    emb = emb.at[pad_idx].set(0.0)
    # Fold the char-embedding table into the conv weights: Wk = emb @ wconv[k] -> (K, V, F).
    wfold = jnp.einsum('ve,kef->kvf', emb, wconv).astype(jnp.float32)
    # Fuse the two Highway linears into one lane-dense (F, 2F) matmul.
    w_hw = jnp.concatenate([wproj, wgate], axis=1)       # (F, 2F)
    b_hw = jnp.concatenate([bproj, bgate], axis=1)       # (1, 2F)

    # Flatten words; realize Conv1d padding=1 with the (zero-embedding) pad token.
    idx = input_idx.reshape(n, max_word_len).astype(jnp.int32)
    idx = jnp.pad(idx, ((0, 0), (1, 1)), constant_values=pad_idx)
    lp = max_word_len + 2

    # Word tile: big enough to amortize per-step overhead, capped by N; pad N to a
    # tile multiple with pad-only words (their outputs are sliced away below).
    tn = max(8, min(_round_up(tn, 8), _round_up(n, 8)))
    n_pad = _round_up(n, tn)
    if n_pad != n:
        idx = jnp.pad(idx, ((0, n_pad - n), (0, 0)), constant_values=pad_idx)

    f_out = _round_up(f, 128)  # lane-dense output store; wrapper slices back to F

    kernel = functools.partial(char_cnn_word_kernel, mm_dtype=compute_dtype)
    out = pl.pallas_call(
        kernel,
        out_shape=jax.ShapeDtypeStruct((n_pad, f_out), jnp.float32),
        grid_spec=pltpu.PrefetchScalarGridSpec(
            num_scalar_prefetch=0,
            grid=(n_pad // tn,),
            in_specs=[
                pl.BlockSpec((tn, lp), lambda i: (i, 0)),
                pl.BlockSpec((k_taps, v, f), lambda i: (0, 0, 0)),
                pl.BlockSpec((1, f), lambda i: (0, 0)),
                pl.BlockSpec((f, 2 * f), lambda i: (0, 0)),
                pl.BlockSpec((1, 2 * f), lambda i: (0, 0)),
            ],
            out_specs=pl.BlockSpec((tn, f_out), lambda i: (i, 0)),
        ),
        compiler_params=pltpu.CompilerParams(
            dimension_semantics=("parallel",),
            vmem_limit_bytes=32 * 1024 * 1024,  # raise v5e's 16 MiB default; safe on v6e/v7x
        ),
    )(idx, wfold, bconv, w_hw, b_hw)

    return out[:n, :f].reshape(sent_len, batch, f)


def reference_forward(input_idx, params, *, pad_idx):
    """Pure-JAX reference matching the PyTorch forward (eval mode)."""
    sent_len, batch, max_word_len = input_idx.shape
    emb, wconv, bconv, wproj, bproj, wgate, bgate = params
    f = wconv.shape[-1]
    x = emb[input_idx.reshape(-1, max_word_len)]                      # (N, L, E)
    x = jnp.pad(x, ((0, 0), (1, 1), (0, 0)))                          # Conv1d padding=1
    l_out = max_word_len + 2 - K_TAPS + 1
    acc = jnp.zeros((x.shape[0], l_out, f), jnp.float32)
    for k in range(K_TAPS):
        acc = acc + jnp.einsum('nle,ef->nlf', x[:, k:k + l_out, :], wconv[k])
    conv = acc + bconv[None, :, :]
    pooled = jnp.max(jax.nn.relu(conv), axis=1)                       # (N, F)
    xproj = jax.nn.relu(pooled @ wproj + bproj)
    xgate = jax.nn.sigmoid(pooled @ wgate + bgate)
    hw = xgate * xproj + (1.0 - xgate) * pooled
    return hw.reshape(sent_len, batch, f)


def init_params(key, *, num_chars, e_char, word_embed_size, pad_idx):
    ks = jax.random.split(key, 7)
    emb = 0.1 * jax.random.normal(ks[0], (num_chars, e_char), jnp.float32)
    emb = emb.at[pad_idx].set(0.0)  # nn.Embedding(padding_idx=pad) -> zero row
    wconv = 0.1 * jax.random.normal(ks[1], (K_TAPS, e_char, word_embed_size), jnp.float32)
    bconv = 0.1 * jax.random.normal(ks[2], (1, word_embed_size), jnp.float32)
    wproj = 0.1 * jax.random.normal(ks[3], (word_embed_size, word_embed_size), jnp.float32)
    bproj = 0.1 * jax.random.normal(ks[4], (1, word_embed_size), jnp.float32)
    wgate = 0.1 * jax.random.normal(ks[5], (word_embed_size, word_embed_size), jnp.float32)
    bgate = 0.1 * jax.random.normal(ks[6], (1, word_embed_size), jnp.float32)
    return (emb, wconv, bconv, wproj, bproj, wgate, bgate)


if __name__ == "__main__":
    # Small, module-consistent shapes.
    SENT_LEN, BATCH, MAX_WORD_LEN = 8, 2, 12
    NUM_CHARS, E_CHAR, WORD_EMBED_SIZE, PAD_IDX = 30, 32, 64, 0

    key = jax.random.PRNGKey(0)
    k_param, k_in, k_in2 = jax.random.split(key, 3)
    params = init_params(k_param, num_chars=NUM_CHARS, e_char=E_CHAR,
                         word_embed_size=WORD_EMBED_SIZE, pad_idx=PAD_IDX)
    input_ = jax.random.randint(k_in, (SENT_LEN, BATCH, MAX_WORD_LEN), 0, NUM_CHARS,
                                dtype=jnp.int32)

    out = model_embeddings_forward(input_, params, pad_idx=PAD_IDX)
    out = jax.block_until_ready(out)
    ref = reference_forward(input_, params, pad_idx=PAD_IDX)
    assert out.shape == (SENT_LEN, BATCH, WORD_EMBED_SIZE), out.shape
    assert jnp.allclose(out, ref, rtol=1e-5, atol=1e-5), "mismatch vs JAX reference"

    # Also exercise the N % tile != 0 (padded tail) path.
    input2 = jax.random.randint(k_in2, (5, 3, MAX_WORD_LEN), 0, NUM_CHARS, dtype=jnp.int32)
    out2 = jax.block_until_ready(
        model_embeddings_forward(input2, params, pad_idx=PAD_IDX))
    ref2 = reference_forward(input2, params, pad_idx=PAD_IDX)
    assert jnp.allclose(out2, ref2, rtol=1e-5, atol=1e-5), "mismatch on padded-tail case"

    print("KERNEL_OK")
</pallas_src>

<mosaic_0001>
module attributes {stable_mosaic.version = 11 : i64} {
  func.func @char_cnn_word_kernel(%arg0: i32, %arg1: memref<16x14xi32, #tpu.memory_space<vmem>>, %arg2: memref<5x30x64xf32, #tpu.memory_space<vmem>>, %arg3: memref<1x64xf32, #tpu.memory_space<vmem>>, %arg4: memref<64x128xf32, #tpu.memory_space<vmem>>, %arg5: memref<1x128xf32, #tpu.memory_space<vmem>>, %arg6: memref<16x128xf32, #tpu.memory_space<vmem>>) attributes {dimension_semantics = [#tpu.dimension_semantics<parallel>], iteration_bounds = array<i64: 1>, scalar_prefetch = 0 : i64, scratch_operands = 0 : i64, tpu.core_type = #tpu.core_type<tc>, window_params = [{transform_indices = @transform_0, window_bounds = array<i64: 16, 14>}, {pipeline_mode = #tpu.pipeline_mode<synchronous>, transform_indices = @transform_1, window_bounds = array<i64: 5, 30, 64>}, {pipeline_mode = #tpu.pipeline_mode<synchronous>, transform_indices = @transform_2, window_bounds = array<i64: 1, 64>}, {pipeline_mode = #tpu.pipeline_mode<synchronous>, transform_indices = @transform_3, window_bounds = array<i64: 64, 128>}, {pipeline_mode = #tpu.pipeline_mode<synchronous>, transform_indices = @transform_4, window_bounds = array<i64: 1, 128>}, {transform_indices = @transform_5, window_bounds = array<i64: 16, 128>}]} {
    %c0 = arith.constant 0 : index
    %c0_0 = arith.constant 0 : index
    %0 = vector.load %arg1[%c0, %c0_0] : memref<16x14xi32, #tpu.memory_space<vmem>>, vector<16x14xi32>
    %1 = tpu.iota {dimensions = array<i32: 1>} : vector<16x30xi32>
    %2 = vector.extract_strided_slice %0 {offsets = [0, 0], sizes = [16, 1], strides = [1, 1]} : vector<16x14xi32> to vector<16x1xi32>
    %3 = vector.broadcast %2 : vector<16x1xi32> to vector<16x30xi32>
    %4 = arith.cmpi eq, %3, %1 : vector<16x30xi32>
    %5 = arith.extui %4 : vector<16x30xi1> to vector<16x30xi32>
    %6 = arith.sitofp %5 : vector<16x30xi32> to vector<16x30xf32>
    %7 = vector.extract_strided_slice %0 {offsets = [0, 1], sizes = [16, 1], strides = [1, 1]} : vector<16x14xi32> to vector<16x1xi32>
    %8 = vector.broadcast %7 : vector<16x1xi32> to vector<16x30xi32>
    %9 = arith.cmpi eq, %8, %1 : vector<16x30xi32>
    %10 = arith.extui %9 : vector<16x30xi1> to vector<16x30xi32>
    %11 = arith.sitofp %10 : vector<16x30xi32> to vector<16x30xf32>
    %12 = vector.extract_strided_slice %0 {offsets = [0, 2], sizes = [16, 1], strides = [1, 1]} : vector<16x14xi32> to vector<16x1xi32>
    %13 = vector.broadcast %12 : vector<16x1xi32> to vector<16x30xi32>
    %14 = arith.cmpi eq, %13, %1 : vector<16x30xi32>
    %15 = arith.extui %14 : vector<16x30xi1> to vector<16x30xi32>
    %16 = arith.sitofp %15 : vector<16x30xi32> to vector<16x30xf32>
    %17 = vector.extract_strided_slice %0 {offsets = [0, 3], sizes = [16, 1], strides = [1, 1]} : vector<16x14xi32> to vector<16x1xi32>
    %18 = vector.broadcast %17 : vector<16x1xi32> to vector<16x30xi32>
    %19 = arith.cmpi eq, %18, %1 : vector<16x30xi32>
    %20 = arith.extui %19 : vector<16x30xi1> to vector<16x30xi32>
    %21 = arith.sitofp %20 : vector<16x30xi32> to vector<16x30xf32>
    %22 = vector.extract_strided_slice %0 {offsets = [0, 4], sizes = [16, 1], strides = [1, 1]} : vector<16x14xi32> to vector<16x1xi32>
    %23 = vector.broadcast %22 : vector<16x1xi32> to vector<16x30xi32>
    %24 = arith.cmpi eq, %23, %1 : vector<16x30xi32>
    %25 = arith.extui %24 : vector<16x30xi1> to vector<16x30xi32>
    %26 = arith.sitofp %25 : vector<16x30xi32> to vector<16x30xf32>
    %27 = vector.extract_strided_slice %0 {offsets = [0, 5], sizes = [16, 1], strides = [1, 1]} : vector<16x14xi32> to vector<16x1xi32>
    %28 = vector.broadcast %27 : vector<16x1xi32> to vector<16x30xi32>
    %29 = arith.cmpi eq, %28, %1 : vector<16x30xi32>
    %30 = arith.extui %29 : vector<16x30xi1> to vector<16x30xi32>
    %31 = arith.sitofp %30 : vector<16x30xi32> to vector<16x30xf32>
    %32 = vector.extract_strided_slice %0 {offsets = [0, 6], sizes = [16, 1], strides = [1, 1]} : vector<16x14xi32> to vector<16x1xi32>
    %33 = vector.broadcast %32 : vector<16x1xi32> to vector<16x30xi32>
    %34 = arith.cmpi eq, %33, %1 : vector<16x30xi32>
    %35 = arith.extui %34 : vector<16x30xi1> to vector<16x30xi32>
    %36 = arith.sitofp %35 : vector<16x30xi32> to vector<16x30xf32>
    %37 = vector.extract_strided_slice %0 {offsets = [0, 7], sizes = [16, 1], strides = [1, 1]} : vector<16x14xi32> to vector<16x1xi32>
    %38 = vector.broadcast %37 : vector<16x1xi32> to vector<16x30xi32>
    %39 = arith.cmpi eq, %38, %1 : vector<16x30xi32>
    %40 = arith.extui %39 : vector<16x30xi1> to vector<16x30xi32>
    %41 = arith.sitofp %40 : vector<16x30xi32> to vector<16x30xf32>
    %42 = vector.extract_strided_slice %0 {offsets = [0, 8], sizes = [16, 1], strides = [1, 1]} : vector<16x14xi32> to vector<16x1xi32>
    %43 = vector.broadcast %42 : vector<16x1xi32> to vector<16x30xi32>
    %44 = arith.cmpi eq, %43, %1 : vector<16x30xi32>
    %45 = arith.extui %44 : vector<16x30xi1> to vector<16x30xi32>
    %46 = arith.sitofp %45 : vector<16x30xi32> to vector<16x30xf32>
    %47 = vector.extract_strided_slice %0 {offsets = [0, 9], sizes = [16, 1], strides = [1, 1]} : vector<16x14xi32> to vector<16x1xi32>
    %48 = vector.broadcast %47 : vector<16x1xi32> to vector<16x30xi32>
    %49 = arith.cmpi eq, %48, %1 : vector<16x30xi32>
    %50 = arith.extui %49 : vector<16x30xi1> to vector<16x30xi32>
    %51 = arith.sitofp %50 : vector<16x30xi32> to vector<16x30xf32>
    %52 = vector.extract_strided_slice %0 {offsets = [0, 10], sizes = [16, 1], strides = [1, 1]} : vector<16x14xi32> to vector<16x1xi32>
    %53 = vector.broadcast %52 : vector<16x1xi32> to vector<16x30xi32>
    %54 = arith.cmpi eq, %53, %1 : vector<16x30xi32>
    %55 = arith.extui %54 : vector<16x30xi1> to vector<16x30xi32>
    %56 = arith.sitofp %55 : vector<16x30xi32> to vector<16x30xf32>
    %57 = vector.extract_strided_slice %0 {offsets = [0, 11], sizes = [16, 1], strides = [1, 1]} : vector<16x14xi32> to vector<16x1xi32>
    %58 = vector.broadcast %57 : vector<16x1xi32> to vector<16x30xi32>
    %59 = arith.cmpi eq, %58, %1 : vector<16x30xi32>
    %60 = arith.extui %59 : vector<16x30xi1> to vector<16x30xi32>
    %61 = arith.sitofp %60 : vector<16x30xi32> to vector<16x30xf32>
    %62 = vector.extract_strided_slice %0 {offsets = [0, 12], sizes = [16, 1], strides = [1, 1]} : vector<16x14xi32> to vector<16x1xi32>
    %63 = vector.broadcast %62 : vector<16x1xi32> to vector<16x30xi32>
    %64 = arith.cmpi eq, %63, %1 : vector<16x30xi32>
    %65 = arith.extui %64 : vector<16x30xi1> to vector<16x30xi32>
    %66 = arith.sitofp %65 : vector<16x30xi32> to vector<16x30xf32>
    %67 = vector.extract_strided_slice %0 {offsets = [0, 13], sizes = [16, 1], strides = [1, 1]} : vector<16x14xi32> to vector<16x1xi32>
    %68 = vector.broadcast %67 : vector<16x1xi32> to vector<16x30xi32>
    %69 = arith.cmpi eq, %68, %1 : vector<16x30xi32>
    %70 = arith.extui %69 : vector<16x30xi1> to vector<16x30xi32>
    %71 = arith.sitofp %70 : vector<16x30xi32> to vector<16x30xf32>
    %72 = tpu.concatenate %6, %11, %16, %21, %26, %31, %36, %41, %46, %51, %56, %61, %66, %71 in 0 : vector<16x30xf32>, vector<16x30xf32>, vector<16x30xf32>, vector<16x30xf32>, vector<16x30xf32>, vector<16x30xf32>, vector<16x30xf32>, vector<16x30xf32>, vector<16x30xf32>, vector<16x30xf32>, vector<16x30xf32>, vector<16x30xf32>, vector<16x30xf32>, vector<16x30xf32> -> vector<224x30xf32>
    %73 = vector.extract_strided_slice %72 {offsets = [0, 0], sizes = [160, 30], strides = [1, 1]} : vector<224x30xf32> to vector<160x30xf32>
    %c0_1 = arith.constant 0 : index
    %c0_2 = arith.constant 0 : index
    %c0_3 = arith.constant 0 : index
    %74 = vector.load %arg2[%c0_1, %c0_2, %c0_3] : memref<5x30x64xf32, #tpu.memory_space<vmem>>, vector<1x30x64xf32>
    %75 = vector.shape_cast %74 : vector<1x30x64xf32> to vector<30x64xf32>
    %cst = arith.constant dense<0.000000e+00> : vector<160x64xf32>
    %76 = tpu.matmul %73, %75, %cst {dimension_numbers = #tpu.dot_dimension_numbers<[1], [0], [0], [1], [0, 0, 1, 1], [], []>} : vector<160x30xf32>, vector<30x64xf32>, vector<160x64xf32> -> vector<160x64xf32>
    %77 = vector.extract_strided_slice %72 {offsets = [16, 0], sizes = [160, 30], strides = [1, 1]} : vector<224x30xf32> to vector<160x30xf32>
    %c1 = arith.constant 1 : index
    %c0_4 = arith.constant 0 : index
    %c0_5 = arith.constant 0 : index
    %78 = vector.load %arg2[%c1, %c0_4, %c0_5] : memref<5x30x64xf32, #tpu.memory_space<vmem>>, vector<1x30x64xf32>
    %79 = vector.shape_cast %78 : vector<1x30x64xf32> to vector<30x64xf32>
    %cst_6 = arith.constant dense<0.000000e+00> : vector<160x64xf32>
    %80 = tpu.matmul %77, %79, %cst_6 {dimension_numbers = #tpu.dot_dimension_numbers<[1], [0], [0], [1], [0, 0, 1, 1], [], []>} : vector<160x30xf32>, vector<30x64xf32>, vector<160x64xf32> -> vector<160x64xf32>
    %81 = arith.addf %76, %80 : vector<160x64xf32>
    %82 = vector.extract_strided_slice %72 {offsets = [32, 0], sizes = [160, 30], strides = [1, 1]} : vector<224x30xf32> to vector<160x30xf32>
    %c2 = arith.constant 2 : index
    %c0_7 = arith.constant 0 : index
    %c0_8 = arith.constant 0 : index
    %83 = vector.load %arg2[%c2, %c0_7, %c0_8] : memref<5x30x64xf32, #tpu.memory_space<vmem>>, vector<1x30x64xf32>
    %84 = vector.shape_cast %83 : vector<1x30x64xf32> to vector<30x64xf32>
    %cst_9 = arith.constant dense<0.000000e+00> : vector<160x64xf32>
    %85 = tpu.matmul %82, %84, %cst_9 {dimension_numbers = #tpu.dot_dimension_numbers<[1], [0], [0], [1], [0, 0, 1, 1], [], []>} : vector<160x30xf32>, vector<30x64xf32>, vector<160x64xf32> -> vector<160x64xf32>
    %86 = arith.addf %81, %85 : vector<160x64xf32>
    %87 = vector.extract_strided_slice %72 {offsets = [48, 0], sizes = [160, 30], strides = [1, 1]} : vector<224x30xf32> to vector<160x30xf32>
    %c3 = arith.constant 3 : index
    %c0_10 = arith.constant 0 : index
    %c0_11 = arith.constant 0 : index
    %88 = vector.load %arg2[%c3, %c0_10, %c0_11] : memref<5x30x64xf32, #tpu.memory_space<vmem>>, vector<1x30x64xf32>
    %89 = vector.shape_cast %88 : vector<1x30x64xf32> to vector<30x64xf32>
    %cst_12 = arith.constant dense<0.000000e+00> : vector<160x64xf32>
    %90 = tpu.matmul %87, %89, %cst_12 {dimension_numbers = #tpu.dot_dimension_numbers<[1], [0], [0], [1], [0, 0, 1, 1], [], []>} : vector<160x30xf32>, vector<30x64xf32>, vector<160x64xf32> -> vector<160x64xf32>
    %91 = arith.addf %86, %90 : vector<160x64xf32>
    %92 = vector.extract_strided_slice %72 {offsets = [64, 0], sizes = [160, 30], strides = [1, 1]} : vector<224x30xf32> to vector<160x30xf32>
    %c4 = arith.constant 4 : index
    %c0_13 = arith.constant 0 : index
    %c0_14 = arith.constant 0 : index
    %93 = vector.load %arg2[%c4, %c0_13, %c0_14] : memref<5x30x64xf32, #tpu.memory_space<vmem>>, vector<1x30x64xf32>
    %94 = vector.shape_cast %93 : vector<1x30x64xf32> to vector<30x64xf32>
    %cst_15 = arith.constant dense<0.000000e+00> : vector<160x64xf32>
    %95 = tpu.matmul %92, %94, %cst_15 {dimension_numbers = #tpu.dot_dimension_numbers<[1], [0], [0], [1], [0, 0, 1, 1], [], []>} : vector<160x30xf32>, vector<30x64xf32>, vector<160x64xf32> -> vector<160x64xf32>
    %96 = arith.addf %91, %95 : vector<160x64xf32>
    %97 = vector.extract_strided_slice %96 {offsets = [0, 0], sizes = [16, 64], strides = [1, 1]} : vector<160x64xf32> to vector<16x64xf32>
    %98 = vector.extract_strided_slice %96 {offsets = [16, 0], sizes = [16, 64], strides = [1, 1]} : vector<160x64xf32> to vector<16x64xf32>
    %99 = arith.maximumf %97, %98 : vector<16x64xf32>
    %100 = vector.extract_strided_slice %96 {offsets = [32, 0], sizes = [16, 64], strides = [1, 1]} : vector<160x64xf32> to vector<16x64xf32>
    %101 = arith.maximumf %99, %100 : vector<16x64xf32>
    %102 = vector.extract_strided_slice %96 {offsets = [48, 0], sizes = [16, 64], strides = [1, 1]} : vector<160x64xf32> to vector<16x64xf32>
    %103 = arith.maximumf %101, %102 : vector<16x64xf32>
    %104 = vector.extract_strided_slice %96 {offsets = [64, 0], sizes = [16, 64], strides = [1, 1]} : vector<160x64xf32> to vector<16x64xf32>
    %105 = arith.maximumf %103, %104 : vector<16x64xf32>
    %106 = vector.extract_strided_slice %96 {offsets = [80, 0], sizes = [16, 64], strides = [1, 1]} : vector<160x64xf32> to vector<16x64xf32>
    %107 = arith.maximumf %105, %106 : vector<16x64xf32>
    %108 = vector.extract_strided_slice %96 {offsets = [96, 0], sizes = [16, 64], strides = [1, 1]} : vector<160x64xf32> to vector<16x64xf32>
    %109 = arith.maximumf %107, %108 : vector<16x64xf32>
    %110 = vector.extract_strided_slice %96 {offsets = [112, 0], sizes = [16, 64], strides = [1, 1]} : vector<160x64xf32> to vector<16x64xf32>
    %111 = arith.maximumf %109, %110 : vector<16x64xf32>
    %112 = vector.extract_strided_slice %96 {offsets = [128, 0], sizes = [16, 64], strides = [1, 1]} : vector<160x64xf32> to vector<16x64xf32>
    %113 = arith.maximumf %111, %112 : vector<16x64xf32>
    %114 = vector.extract_strided_slice %96 {offsets = [144, 0], sizes = [16, 64], strides = [1, 1]} : vector<160x64xf32> to vector<16x64xf32>
    %115 = arith.maximumf %113, %114 : vector<16x64xf32>
    %c0_16 = arith.constant 0 : index
    %c0_17 = arith.constant 0 : index
    %116 = vector.load %arg3[%c0_16, %c0_17] : memref<1x64xf32, #tpu.memory_space<vmem>>, vector<1x64xf32>
    %117 = vector.broadcast %116 : vector<1x64xf32> to vector<16x64xf32>
    %118 = arith.addf %115, %117 : vector<16x64xf32>
    %cst_18 = arith.constant 0.000000e+00 : f32
    %119 = vector.broadcast %cst_18 : f32 to vector<16x64xf32>
    %120 = arith.maximumf %118, %119 : vector<16x64xf32>
    %c0_19 = arith.constant 0 : index
    %c0_20 = arith.constant 0 : index
    %121 = vector.load %arg4[%c0_19, %c0_20] : memref<64x128xf32, #tpu.memory_space<vmem>>, vector<64x128xf32>
    %cst_21 = arith.constant dense<0.000000e+00> : vector<16x128xf32>
    %122 = tpu.matmul %120, %121, %cst_21 {dimension_numbers = #tpu.dot_dimension_numbers<[1], [0], [0], [1], [0, 0, 1, 1], [], []>} : vector<16x64xf32>, vector<64x128xf32>, vector<16x128xf32> -> vector<16x128xf32>
    %c0_22 = arith.constant 0 : index
    %c0_23 = arith.constant 0 : index
    %123 = vector.load %arg5[%c0_22, %c0_23] : memref<1x128xf32, #tpu.memory_space<vmem>>, vector<1x128xf32>
    %124 = vector.broadcast %123 : vector<1x128xf32> to vector<16x128xf32>
    %125 = arith.addf %122, %124 : vector<16x128xf32>
    %126 = vector.extract_strided_slice %125 {offsets = [0, 0], sizes = [16, 64], strides = [1, 1]} : vector<16x128xf32> to vector<16x64xf32>
    %cst_24 = arith.constant 0.000000e+00 : f32
    %127 = vector.broadcast %cst_24 : f32 to vector<16x64xf32>
    %128 = arith.maximumf %126, %127 : vector<16x64xf32>
    %129 = vector.extract_strided_slice %125 {offsets = [0, 64], sizes = [16, 64], strides = [1, 1]} : vector<16x128xf32> to vector<16x64xf32>
    %130 = arith.negf %129 : vector<16x64xf32>
    %131 = math.exp %130 : vector<16x64xf32>
    %cst_25 = arith.constant 1.000000e+00 : f32
    %132 = vector.broadcast %cst_25 : f32 to vector<16x64xf32>
    %133 = arith.addf %132, %131 : vector<16x64xf32>
    %134 = arith.divf %132, %133 : vector<16x64xf32>
    %135 = arith.mulf %134, %128 : vector<16x64xf32>
    %cst_26 = arith.constant 1.000000e+00 : f32
    %136 = vector.broadcast %cst_26 : f32 to vector<16x64xf32>
    %137 = arith.subf %136, %134 : vector<16x64xf32>
    %138 = arith.mulf %137, %120 : vector<16x64xf32>
    %139 = arith.addf %135, %138 : vector<16x64xf32>
    %cst_27 = arith.constant 0.000000e+00 : f32
    %140 = vector.broadcast %cst_27 : f32 to vector<16x64xf32>
    %141 = tpu.concatenate %139, %140 in 1 : vector<16x64xf32>, vector<16x64xf32> -> vector<16x128xf32>
    %c0_28 = arith.constant 0 : index
    %c0_29 = arith.constant 0 : index
    %142 = vector.load %arg6[%c0_28, %c0_29] : memref<16x128xf32, #tpu.memory_space<vmem>>, vector<16x128xf32>
    tpu.vector_store %arg6[%c0_28, %c0_29], %141 {strides = array<i32>} : memref<16x128xf32, #tpu.memory_space<vmem>>, vector<16x128xf32>,
    return
  }
  func.func @transform_0(%arg0: i32) -> (i32, i32) {
    %c0_i32 = arith.constant 0 : i32
    %c0_i32_0 = arith.constant 0 : i32
    return %arg0, %c0_i32 : i32, i32
  }
  func.func @transform_1(%arg0: i32) -> (i32, i32, i32) {
    %c0_i32 = arith.constant 0 : i32
    %c0_i32_0 = arith.constant 0 : i32
    %c0_i32_1 = arith.constant 0 : i32
    %c0_i32_2 = arith.constant 0 : i32
    return %c0_i32, %c0_i32_0, %c0_i32_1 : i32, i32, i32
  }
  func.func @transform_2(%arg0: i32) -> (i32, i32) {
    %c0_i32 = arith.constant 0 : i32
    %c0_i32_0 = arith.constant 0 : i32
    %c0_i32_1 = arith.constant 0 : i32
    return %c0_i32, %c0_i32_0 : i32, i32
  }
  func.func @transform_3(%arg0: i32) -> (i32, i32) {
    %c0_i32 = arith.constant 0 : i32
    %c0_i32_0 = arith.constant 0 : i32
    %c0_i32_1 = arith.constant 0 : i32
    return %c0_i32, %c0_i32_0 : i32, i32
  }
  func.func @transform_4(%arg0: i32) -> (i32, i32) {
    %c0_i32 = arith.constant 0 : i32
    %c0_i32_0 = arith.constant 0 : i32
    %c0_i32_1 = arith.constant 0 : i32
    return %c0_i32, %c0_i32_0 : i32, i32
  }
  func.func @transform_5(%arg0: i32) -> (i32, i32) {
    %c0_i32 = arith.constant 0 : i32
    %c0_i32_0 = arith.constant 0 : i32
    return %arg0, %c0_i32 : i32, i32
  }
}

</mosaic_0001>

<llo_original>
// kernel: tpu_custom_call.1
$region0: #{tpu_custom_call.1}
  #allocation0 [shape = 'u32[]', space=smem, size = 0x4, offset = 0x4, fixed_abs, tag = 'smem constant byte address 0x4 - core index']
  #allocation1 [shape = 'u32[72,128]{1,0:T(1,128)}', space=vmem, size = 0x9000, scoped, tag = 'internal scratch']
  %s0 = inlined_call_operand.hbm [shape: s32[16,14], index: 0, kind: input, shape index: {}]
  %s1 = inlined_call_operand.hbm [shape: f32[5,30,64], index: 1, kind: input, shape index: {}]
  %s2 = inlined_call_operand.vmem [shape: f32[1,64], index: 2, kind: input, shape index: {}]
  %s3 = inlined_call_operand.hbm [shape: f32[64,128], index: 3, kind: input, shape index: {}]
  %s4 = inlined_call_operand.vmem [shape: f32[1,128], index: 4, kind: input, shape index: {}]
  %s5 = inlined_call_operand.hbm [shape: f32[16,128], index: 5, kind: output, shape index: {}]
  %s6 = sld [smem:[#allocation0]]
  $region42: #{tpu_custom_call.1} parent=0
    _
  %s8 = ssub.s32 1, %s6
  %s9 = scalar_select 0, %s8, %s6
  $region1: #{tpu_custom_call.1} parent=0
    #allocation2 [shape = 'u8[8192]{0}', space=vmem, size = 0x2000, scoped, tag = 'input window, operand 0, single buffered']
    #allocation3 [shape = 's32[1]{0}', space=sflag, size = 0x4, scoped, tag = 'scoped memory for tpu_custom_call.1']
    #allocation4 [shape = 's32[1]{0}', space=sflag, size = 0x4, scoped, tag = 'scoped memory for tpu_custom_call.1']
    #allocation5 [shape = 'u8[81920]{0}', space=vmem, size = 0x14000, scoped, tag = 'input window, operand 1, single buffered']
    #allocation6 [shape = 's32[1]{0}', space=sflag, size = 0x4, scoped, tag = 'scoped memory for tpu_custom_call.1']
    #allocation7 [shape = 'u8[32768]{0}', space=vmem, size = 0x8000, scoped, tag = 'input window, operand 3, single buffered']
    #allocation8 [shape = 'u8[8192]{0}', space=vmem, size = 0x2000, scoped, tag = 'output window, operand 0, single buffered']
    %10 = vsyncpa [#allocation3], 0
    %11 = vsyncpa [#allocation6], 0
    %12 = vsyncpa [#allocation4], 0
    // Predicated region
    $region2: #{tpu_custom_call.1} parent=1 // pred_check
      _
    $region3: #{tpu_custom_call.1} parent=1 // pred_check_branch
      %14 = sbr.rel (0) target = $region5
    $region4: #{tpu_custom_call.1} parent=1 // pred_region
      %16 = vsyncadd [#allocation3], 0
      %s17 = sshll.u32 %s0, 4
      %s18 = int_to_ptr.hbm [resolvable:$true] %s17
      %s19 = sshll.u32 [#allocation2], 4
      %s20 = int_to_ptr.vmem [resolvable:$true] %s19
      %25 = dma.hbm_to_vmem [thread:$0]  %s18, 256, %s20, [#allocation3], 128, 128, 8
    $region5: #{tpu_custom_call.1} parent=1 // pred_fallthru
      _
    // Predicated region
    $region6: #{tpu_custom_call.1} parent=1 // pred_check
      _
    $region7: #{tpu_custom_call.1} parent=1 // pred_check_branch
      %27 = sbr.rel (0) target = $region9
    $region8: #{tpu_custom_call.1} parent=1 // pred_region
      %29 = vsyncadd [#allocation6], 0
      %s30 = sshll.u32 %s1, 4
      %s31 = int_to_ptr.hbm [resolvable:$true] %s30
      %s32 = sshll.u32 [#allocation5], 4
      %s33 = int_to_ptr.vmem [resolvable:$true] %s32
      %38 = dma.hbm_to_vmem [thread:$0]  %s31, 2560, %s33, [#allocation6], 128, 128, 8
    $region9: #{tpu_custom_call.1} parent=1 // pred_fallthru
      _
    // Predicated region
    $region10: #{tpu_custom_call.1} parent=1 // pred_check
      _
    $region11: #{tpu_custom_call.1} parent=1 // pred_check_branch
      %40 = sbr.rel (0) target = $region13
    $region12: #{tpu_custom_call.1} parent=1 // pred_region
      _
    $region13: #{tpu_custom_call.1} parent=1 // pred_fallthru
      _
    // Predicated region
    $region14: #{tpu_custom_call.1} parent=1 // pred_check
      _
    $region15: #{tpu_custom_call.1} parent=1 // pred_check_branch
      %42 = sbr.rel (0) target = $region17
    $region16: #{tpu_custom_call.1} parent=1 // pred_region
      %44 = vsyncadd [#allocation6], 0
      %s45 = sshll.u32 %s3, 4
      %s46 = int_to_ptr.hbm [resolvable:$true] %s45
      %s47 = sshll.u32 [#allocation7], 4
      %s48 = int_to_ptr.vmem [resolvable:$true] %s47
      %53 = dma.hbm_to_vmem [thread:$0]  %s46, 1024, %s48, [#allocation6], 128, 128, 8
    $region17: #{tpu_custom_call.1} parent=1 // pred_fallthru
      _
    // Predicated region
    $region18: #{tpu_custom_call.1} parent=1 // pred_check
      _
    $region19: #{tpu_custom_call.1} parent=1 // pred_check_branch
      %55 = sbr.rel (0) target = $region21
    $region20: #{tpu_custom_call.1} parent=1 // pred_region
      _
    $region21: #{tpu_custom_call.1} parent=1 // pred_fallthru
      _
    // Predicated region
    $region22: #{tpu_custom_call.1} parent=1 // pred_check
      _
    $region23: #{tpu_custom_call.1} parent=1 // pred_check_branch
      %57 = sbr.rel (0) target = $region25
    $region24: #{tpu_custom_call.1} parent=1 // pred_region
      %59 = dma.done [#allocation3], 256
    $region25: #{tpu_custom_call.1} parent=1 // pred_fallthru
      _
    // Predicated region
    $region26: #{tpu_custom_call.1} parent=1 // pred_check
      _
    $region27: #{tpu_custom_call.1} parent=1 // pred_check_branch
      %61 = sbr.rel (0) target = $region29
    $region28: #{tpu_custom_call.1} parent=1 // pred_region
      %63 = dma.done [#allocation6], 2560
    $region29: #{tpu_custom_call.1} parent=1 // pred_fallthru
      _
    // Predicated region
    $region30: #{tpu_custom_call.1} parent=1 // pred_check
      _
    $region31: #{tpu_custom_call.1} parent=1 // pred_check_branch
      %65 = sbr.rel (0) target = $region33
    $region32: #{tpu_custom_call.1} parent=1 // pred_region
      %67 = dma.done [#allocation6], 1024
    $region33: #{tpu_custom_call.1} parent=1 // pred_fallthru
      _
    %v68 = vld [vmem:[#allocation2] sm:$0xff]
    %v69 = vld [vmem:[#allocation2 + $0x8] sm:$0xff]
    %v70 = vlaneseq
    %v71 = vand.u32 %v70, 127
    %72 = vset.pattern.permute.xlu0 0
    %73 = vperm.xlu0 %72, %v68
    %v74 = vpop.permute.xlu0 %73
    %75 = vset.pattern.permute.xlu0 0
    %76 = vperm.xlu0 %75, %v69
    %v77 = vpop.permute.xlu0 %76
    %vm78 = vcmp.eq.s32.totalorder %v74, %v71
    %vm79 = vcmp.eq.s32.totalorder %v77, %v71
    %v80 = vsel %vm78, 1, 0
    %v81 = vsel %vm79, 1, 0
    %v82 = vcvt.s32.f32 %v80
    %v83 = vcvt.s32.f32 %v81
    %84 = vset.pattern.permute.xlu0 1
    %85 = vperm.xlu0 %84, %v68
    %v86 = vpop.permute.xlu0 %85
    %87 = vset.pattern.permute.xlu0 1
    %88 = vperm.xlu0 %87, %v69
    %v89 = vpop.permute.xlu0 %88
    %vm90 = vcmp.eq.s32.totalorder %v86, %v71
    %vm91 = vcmp.eq.s32.totalorder %v89, %v71
    %v92 = vsel %vm90, 1, 0
    %v93 = vsel %vm91, 1, 0
    %v94 = vcvt.s32.f32 %v92
    %v95 = vcvt.s32.f32 %v93
    %96 = vset.pattern.permute.xlu0 2
    %97 = vperm.xlu0 %96, %v68
    %v98 = vpop.permute.xlu0 %97
    %99 = vset.pattern.permute.xlu0 2
    %100 = vperm.xlu0 %99, %v69
    %v101 = vpop.permute.xlu0 %100
    %vm102 = vcmp.eq.s32.totalorder %v98, %v71
    %vm103 = vcmp.eq.s32.totalorder %v101, %v71
    %v104 = vsel %vm102, 1, 0
    %v105 = vsel %vm103, 1, 0
    %v106 = vcvt.s32.f32 %v104
    %v107 = vcvt.s32.f32 %v105
    %108 = vset.pattern.permute.xlu0 3
    %109 = vperm.xlu0 %108, %v68
    %v110 = vpop.permute.xlu0 %109
    %111 = vset.pattern.permute.xlu0 3
    %112 = vperm.xlu0 %111, %v69
    %v113 = vpop.permute.xlu0 %112
    %vm114 = vcmp.eq.s32.totalorder %v110, %v71
    %vm115 = vcmp.eq.s32.totalorder %v113, %v71
    %v116 = vsel %vm114, 1, 0
    %v117 = vsel %vm115, 1, 0
    %v118 = vcvt.s32.f32 %v116
    %v119 = vcvt.s32.f32 %v117
    %120 = vset.pattern.permute.xlu0 4
    %121 = vperm.xlu0 %120, %v68
    %v122 = vpop.permute.xlu0 %121
    %123 = vset.pattern.permute.xlu0 4
    %124 = vperm.xlu0 %123, %v69
    %v125 = vpop.permute.xlu0 %124
    %vm126 = vcmp.eq.s32.totalorder %v122, %v71
    %vm127 = vcmp.eq.s32.totalorder %v125, %v71
    %v128 = vsel %vm126, 1, 0
    %v129 = vsel %vm127, 1, 0
    %v130 = vcvt.s32.f32 %v128
    %v131 = vcvt.s32.f32 %v129
    %132 = vset.pattern.permute.xlu0 5
    %133 = vperm.xlu0 %132, %v68
    %v134 = vpop.permute.xlu0 %133
    %135 = vset.pattern.permute.xlu0 5
    %136 = vperm.xlu0 %135, %v69
    %v137 = vpop.permute.xlu0 %136
    %vm138 = vcmp.eq.s32.totalorder %v134, %v71
    %vm139 = vcmp.eq.s32.totalorder %v137, %v71
    %v140 = vsel %vm138, 1, 0
    %v141 = vsel %vm139, 1, 0
    %v142 = vcvt.s32.f32 %v140
    %v143 = vcvt.s32.f32 %v141
    %144 = vset.pattern.permute.xlu0 6
    %145 = vperm.xlu0 %144, %v68
    %v146 = vpop.permute.xlu0 %145
    %147 = vset.pattern.permute.xlu0 6
    %148 = vperm.xlu0 %147, %v69
    %v149 = vpop.permute.xlu0 %148
    %vm150 = vcmp.eq.s32.totalorder %v146, %v71
    %vm151 = vcmp.eq.s32.totalorder %v149, %v71
    %v152 = vsel %vm150, 1, 0
    %v153 = vsel %vm151, 1, 0
    %v154 = vcvt.s32.f32 %v152
    %v155 = vcvt.s32.f32 %v153
    %156 = vset.pattern.permute.xlu0 7
    %157 = vperm.xlu0 %156, %v68
    %v158 = vpop.permute.xlu0 %157
    %159 = vset.pattern.permute.xlu0 7
    %160 = vperm.xlu0 %159, %v69
    %v161 = vpop.permute.xlu0 %160
    %vm162 = vcmp.eq.s32.totalorder %v158, %v71
    %vm163 = vcmp.eq.s32.totalorder %v161, %v71
    %v164 = vsel %vm162, 1, 0
    %v165 = vsel %vm163, 1, 0
    %v166 = vcvt.s32.f32 %v164
    %v167 = vcvt.s32.f32 %v165
    %168 = vset.pattern.permute.xlu0 8
    %169 = vperm.xlu0 %168, %v68
    %v170 = vpop.permute.xlu0 %169
    %171 = vset.pattern.permute.xlu0 8
    %172 = vperm.xlu0 %171, %v69
    %v173 = vpop.permute.xlu0 %172
    %vm174 = vcmp.eq.s32.totalorder %v170, %v71
    %vm175 = vcmp.eq.s32.totalorder %v173, %v71
    %v176 = vsel %vm174, 1, 0
    %v177 = vsel %vm175, 1, 0
    %v178 = vcvt.s32.f32 %v176
    %v179 = vcvt.s32.f32 %v177
    %180 = vset.pattern.permute.xlu0 9
    %181 = vperm.xlu0 %180, %v68
    %v182 = vpop.permute.xlu0 %181
    %183 = vset.pattern.permute.xlu0 9
    %184 = vperm.xlu0 %183, %v69
    %v185 = vpop.permute.xlu0 %184
    %vm186 = vcmp.eq.s32.totalorder %v182, %v71
    %vm187 = vcmp.eq.s32.totalorder %v185, %v71
    %v188 = vsel %vm186, 1, 0
    %v189 = vsel %vm187, 1, 0
    %v190 = vcvt.s32.f32 %v188
    %v191 = vcvt.s32.f32 %v189
    %192 = vset.pattern.permute.xlu0 10
    %193 = vperm.xlu0 %192, %v68
    %v194 = vpop.permute.xlu0 %193
    %195 = vset.pattern.permute.xlu0 10
    %196 = vperm.xlu0 %195, %v69
    %v197 = vpop.permute.xlu0 %196
    %vm198 = vcmp.eq.s32.totalorder %v194, %v71
    %vm199 = vcmp.eq.s32.totalorder %v197, %v71
    %v200 = vsel %vm198, 1, 0
    %v201 = vsel %vm199, 1, 0
    %v202 = vcvt.s32.f32 %v200
    %v203 = vcvt.s32.f32 %v201
    %204 = vset.pattern.permute.xlu0 11
    %205 = vperm.xlu0 %204, %v68
    %v206 = vpop.permute.xlu0 %205
    %207 = vset.pattern.permute.xlu0 11
    %208 = vperm.xlu0 %207, %v69
    %v209 = vpop.permute.xlu0 %208
    %vm210 = vcmp.eq.s32.totalorder %v206, %v71
    %vm211 = vcmp.eq.s32.totalorder %v209, %v71
    %v212 = vsel %vm210, 1, 0
    %v213 = vsel %vm211, 1, 0
    %v214 = vcvt.s32.f32 %v212
    %v215 = vcvt.s32.f32 %v213
    %216 = vset.pattern.permute.xlu0 12
    %217 = vperm.xlu0 %216, %v68
    %v218 = vpop.permute.xlu0 %217
    %219 = vset.pattern.permute.xlu0 12
    %220 = vperm.xlu0 %219, %v69
    %v221 = vpop.permute.xlu0 %220
    %vm222 = vcmp.eq.s32.totalorder %v218, %v71
    %vm223 = vcmp.eq.s32.totalorder %v221, %v71
    %v224 = vsel %vm222, 1, 0
    %v225 = vsel %vm223, 1, 0
    %v226 = vcvt.s32.f32 %v224
    %v227 = vcvt.s32.f32 %v225
    %228 = vset.pattern.permute.xlu0 13
    %229 = vperm.xlu0 %228, %v68
    %v230 = vpop.permute.xlu0 %229
    %231 = vset.pattern.permute.xlu0 13
    %232 = vperm.xlu0 %231, %v69
    %v233 = vpop.permute.xlu0 %232
    %vm234 = vcmp.eq.s32.totalorder %v230, %v71
    %vm235 = vcmp.eq.s32.totalorder %v233, %v71
    %v236 = vsel %vm234, 1, 0
    %v237 = vsel %vm235, 1, 0
    %v238 = vcvt.s32.f32 %v236
    %v239 = vcvt.s32.f32 %v237
    %v240 = vld [vmem:[#allocation5] sm:$0xff]
    %v241 = vld [vmem:[#allocation5 + $0x8] sm:$0xff]
    %v242 = vld [vmem:[#allocation5 + $0x10] sm:$0xff]
    %v243 = vld [vmem:[#allocation5 + $0x18] sm:$0x3f]
    %s244 = scalar_lea.vmem [#allocation5], 32
    %v245 = vld [vmem:[%s244] sm:$0xff]
    %v246 = vld [vmem:[%s244 + $0x8] sm:$0xff]
    %v247 = vld [vmem:[%s244 + $0x10] sm:$0xff]
    %v248 = vld [vmem:[%s244 + $0x18] sm:$0x3f]
    %vm249 = vcmask 244736
    %v251 = vsel %vm249, %v94, 0
    %v254 = vsel %vm249, %v95, 0
    %v257 = vsel %vm249, %v106, 0
    %v260 = vsel %vm249, %v107, 0
    %v263 = vsel %vm249, %v118, 0
    %v266 = vsel %vm249, %v119, 0
    %v269 = vsel %vm249, %v130, 0
    %v272 = vsel %vm249, %v131, 0
    %v275 = vsel %vm249, %v142, 0
    %v278 = vsel %vm249, %v143, 0
    %v281 = vsel %vm249, %v154, 0
    %v284 = vsel %vm249, %v155, 0
    %v287 = vsel %vm249, %v166, 0
    %v290 = vsel %vm249, %v167, 0
    %v293 = vsel %vm249, %v178, 0
    %v296 = vsel %vm249, %v179, 0
    %v299 = vsel %vm249, %v190, 0
    %v302 = vsel %vm249, %v191, 0
    %v305 = vsel %vm249, %v202, 0
    %v308 = vsel %vm249, %v203, 0
    %vm310 = vcmask 1045504
    %v312 = vsel %vm310, %v248, 0
    %314 = vmatpush.msra.mxu0 0.0
    %315 = vmatpush.msra.mxu0 0.0
    %316 = vmatpush.msra.mxu0 0.0
    %317 = vmatpush.msra.mxu0 0.0
    %318 = vmatpush.msra.mxu0 0.0
    %319 = vmatpush.msra.mxu0 0.0
    %320 = vmatpush.msra.mxu0 0.0
    %321 = vmatpush.msra.mxu0 0.0
    %322 = vmatpush.msra.mxu0 0.0
    %323 = vmatpush.msra.mxu0 0.0
    %324 = vmatpush.msra.mxu0 0.0
    %325 = vmatpush.msra.mxu0 0.0
    %326 = vmatpush.msra.mxu0 %v312
    %327 = vmatpush.msra.mxu0 %v247
    %328 = vmatpush.msra.mxu0 %v246
    %329 = vmatpush.msra.mxu0 %v245
    %330 = vmatmul.f32.gmra.mxu0 %v251
    %v331 = vpop.f32.mrf.mxu0
    %v332 = vadd.f32 0.0, %v331
    %333 = vmatmul.f32.gmra.mxu0 %v254
    %v334 = vpop.f32.mrf.mxu0
    %v335 = vadd.f32 0.0, %v334
    %336 = vmatmul.f32.gmra.mxu0 %v257
    %v337 = vpop.f32.mrf.mxu0
    %v338 = vadd.f32 0.0, %v337
    %339 = vmatmul.f32.gmra.mxu0 %v260
    %v340 = vpop.f32.mrf.mxu0
    %v341 = vadd.f32 0.0, %v340
    %342 = vmatmul.f32.gmra.mxu0 %v263
    %v343 = vpop.f32.mrf.mxu0
    %v344 = vadd.f32 0.0, %v343
    %345 = vmatmul.f32.gmra.mxu0 %v266
    %v346 = vpop.f32.mrf.mxu0
    %v347 = vadd.f32 0.0, %v346
    %348 = vmatmul.f32.gmra.mxu0 %v269
    %v349 = vpop.f32.mrf.mxu0
    %v350 = vadd.f32 0.0, %v349
    %351 = vmatmul.f32.gmra.mxu0 %v272
    %v352 = vpop.f32.mrf.mxu0
    %v353 = vadd.f32 0.0, %v352
    %354 = vmatmul.f32.gmra.mxu0 %v275
    %v355 = vpop.f32.mrf.mxu0
    %v356 = vadd.f32 0.0, %v355
    %357 = vmatmul.f32.gmra.mxu0 %v278
    %v358 = vpop.f32.mrf.mxu0
    %v359 = vadd.f32 0.0, %v358
    %360 = vmatmul.f32.gmra.mxu0 %v281
    %v361 = vpop.f32.mrf.mxu0
    %v362 = vadd.f32 0.0, %v361
    %363 = vmatmul.f32.gmra.mxu0 %v284
    %v364 = vpop.f32.mrf.mxu0
    %v365 = vadd.f32 0.0, %v364
    %366 = vmatmul.f32.gmra.mxu0 %v287
    %v367 = vpop.f32.mrf.mxu0
    %v368 = vadd.f32 0.0, %v367
    %369 = vmatmul.f32.gmra.mxu0 %v290
    %v370 = vpop.f32.mrf.mxu0
    %v371 = vadd.f32 0.0, %v370
    %372 = vmatmul.f32.gmra.mxu0 %v293
    %v373 = vpop.f32.mrf.mxu0
    %v374 = vadd.f32 0.0, %v373
    %375 = vmatmul.f32.gmra.mxu0 %v296
    %v376 = vpop.f32.mrf.mxu0
    %v377 = vadd.f32 0.0, %v376
    %378 = vmatmul.f32.gmra.mxu0 %v299
    %v379 = vpop.f32.mrf.mxu0
    %v380 = vadd.f32 0.0, %v379
    %381 = vmatmul.f32.gmra.mxu0 %v302
    %v382 = vpop.f32.mrf.mxu0
    %v383 = vadd.f32 0.0, %v382
    %384 = vmatmul.f32.gmra.mxu0 %v305
    %v385 = vpop.f32.mrf.mxu0
    %v386 = vadd.f32 0.0, %v385
    %387 = vmatmul.f32.gmra.mxu0 %v308
    %v388 = vpop.f32.mrf.mxu0
    %v389 = vadd.f32 0.0, %v388
    %390 = vdwg.mxu0
    %v392 = vsel %vm249, %v82, 0
    %v395 = vsel %vm249, %v83, 0
    %v398 = vsel %vm310, %v243, 0
    %400 = vmatpush.msra.mxu0 0.0
    %401 = vmatpush.msra.mxu0 0.0
    %402 = vmatpush.msra.mxu0 0.0
    %403 = vmatpush.msra.mxu0 0.0
    %404 = vmatpush.msra.mxu0 0.0
    %405 = vmatpush.msra.mxu0 0.0
    %406 = vmatpush.msra.mxu0 0.0
    %407 = vmatpush.msra.mxu0 0.0
    %408 = vmatpush.msra.mxu0 0.0
    %409 = vmatpush.msra.mxu0 0.0
    %410 = vmatpush.msra.mxu0 0.0
    %411 = vmatpush.msra.mxu0 0.0
    %412 = vmatpush.msra.mxu0 %v398
    %413 = vmatpush.msra.mxu0 %v242
    %414 = vmatpush.msra.mxu0 %v241
    %415 = vmatpush.msra.mxu0 %v240
    %416 = vmatmul.f32.gmra.mxu0 %v392
    %v417 = vpop.f32.mrf.mxu0
    %v418 = vadd.f32 %v332, %v417
    %419 = vmatmul.f32.gmra.mxu0 %v395
    %v420 = vpop.f32.mrf.mxu0
    %v421 = vadd.f32 %v335, %v420
    %422 = vmatmul.f32.gmra.mxu0 %v251
    %v423 = vpop.f32.mrf.mxu0
    %v424 = vadd.f32 %v338, %v423
    %425 = vmatmul.f32.gmra.mxu0 %v254
    %v426 = vpop.f32.mrf.mxu0
    %v427 = vadd.f32 %v341, %v426
    %428 = vmatmul.f32.gmra.mxu0 %v257
    %v429 = vpop.f32.mrf.mxu0
    %v430 = vadd.f32 %v344, %v429
    %431 = vmatmul.f32.gmra.mxu0 %v260
    %v432 = vpop.f32.mrf.mxu0
    %v433 = vadd.f32 %v347, %v432
    %434 = vmatmul.f32.gmra.mxu0 %v263
    %v435 = vpop.f32.mrf.mxu0
    %v436 = vadd.f32 %v350, %v435
    %437 = vmatmul.f32.gmra.mxu0 %v266
    %v438 = vpop.f32.mrf.mxu0
    %v439 = vadd.f32 %v353, %v438
    %440 = vmatmul.f32.gmra.mxu0 %v269
    %v441 = vpop.f32.mrf.mxu0
    %v442 = vadd.f32 %v356, %v441
    %443 = vmatmul.f32.gmra.mxu0 %v272
    %v444 = vpop.f32.mrf.mxu0
    %v445 = vadd.f32 %v359, %v444
    %446 = vmatmul.f32.gmra.mxu0 %v275
    %v447 = vpop.f32.mrf.mxu0
    %v448 = vadd.f32 %v362, %v447
    %449 = vmatmul.f32.gmra.mxu0 %v278
    %v450 = vpop.f32.mrf.mxu0
    %v451 = vadd.f32 %v365, %v450
    %452 = vmatmul.f32.gmra.mxu0 %v281
    %v453 = vpop.f32.mrf.mxu0
    %v454 = vadd.f32 %v368, %v453
    %455 = vmatmul.f32.gmra.mxu0 %v284
    %v456 = vpop.f32.mrf.mxu0
    %v457 = vadd.f32 %v371, %v456
    %458 = vmatmul.f32.gmra.mxu0 %v287
    %v459 = vpop.f32.mrf.mxu0
    %v460 = vadd.f32 %v374, %v459
    %461 = vmatmul.f32.gmra.mxu0 %v290
    %v462 = vpop.f32.mrf.mxu0
    %v463 = vadd.f32 %v377, %v462
    %464 = vmatmul.f32.gmra.mxu0 %v293
    %v465 = vpop.f32.mrf.mxu0
    %v466 = vadd.f32 %v380, %v465
    %467 = vmatmul.f32.gmra.mxu0 %v296
    %v468 = vpop.f32.mrf.mxu0
    %v469 = vadd.f32 %v383, %v468
    %470 = vmatmul.f32.gmra.mxu0 %v299
    %v471 = vpop.f32.mrf.mxu0
    %v472 = vadd.f32 %v386, %v471
    %473 = vmatmul.f32.gmra.mxu0 %v302
    %v474 = vpop.f32.mrf.mxu0
    %v475 = vadd.f32 %v389, %v474
    %476 = vdwg.mxu0
    %s477 = scalar_lea.vmem [#allocation5], 64
    %v478 = vld [vmem:[%s477] sm:$0xff]
    %v479 = vld [vmem:[%s477 + $0x8] sm:$0xff]
    %v480 = vld [vmem:[%s477 + $0x10] sm:$0xff]
    %v481 = vld [vmem:[%s477 + $0x18] sm:$0x3f]
    %v483 = vsel %vm249, %v214, 0
    %v486 = vsel %vm249, %v215, 0
    %v489 = vsel %vm310, %v481, 0
    %491 = vmatpush.msra.mxu0 0.0
    %492 = vmatpush.msra.mxu0 0.0
    %493 = vmatpush.msra.mxu0 0.0
    %494 = vmatpush.msra.mxu0 0.0
    %495 = vmatpush.msra.mxu0 0.0
    %496 = vmatpush.msra.mxu0 0.0
    %497 = vmatpush.msra.mxu0 0.0
    %498 = vmatpush.msra.mxu0 0.0
    %499 = vmatpush.msra.mxu0 0.0
    %500 = vmatpush.msra.mxu0 0.0
    %501 = vmatpush.msra.mxu0 0.0
    %502 = vmatpush.msra.mxu0 0.0
    %503 = vmatpush.msra.mxu0 %v489
    %504 = vmatpush.msra.mxu0 %v480
    %505 = vmatpush.msra.mxu0 %v479
    %506 = vmatpush.msra.mxu0 %v478
    %507 = vmatmul.f32.gmra.mxu0 %v257
    %v508 = vpop.f32.mrf.mxu0
    %v509 = vadd.f32 0.0, %v508
    %510 = vmatmul.f32.gmra.mxu0 %v260
    %v511 = vpop.f32.mrf.mxu0
    %v512 = vadd.f32 0.0, %v511
    %513 = vmatmul.f32.gmra.mxu0 %v263
    %v514 = vpop.f32.mrf.mxu0
    %v515 = vadd.f32 0.0, %v514
    %516 = vmatmul.f32.gmra.mxu0 %v266
    %v517 = vpop.f32.mrf.mxu0
    %v518 = vadd.f32 0.0, %v517
    %519 = vmatmul.f32.gmra.mxu0 %v269
    %v520 = vpop.f32.mrf.mxu0
    %v521 = vadd.f32 0.0, %v520
    %522 = vmatmul.f32.gmra.mxu0 %v272
    %v523 = vpop.f32.mrf.mxu0
    %v524 = vadd.f32 0.0, %v523
    %525 = vmatmul.f32.gmra.mxu0 %v275
    %v526 = vpop.f32.mrf.mxu0
    %v527 = vadd.f32 0.0, %v526
    %528 = vmatmul.f32.gmra.mxu0 %v278
    %v529 = vpop.f32.mrf.mxu0
    %v530 = vadd.f32 0.0, %v529
    %531 = vmatmul.f32.gmra.mxu0 %v281
    %v532 = vpop.f32.mrf.mxu0
    %v533 = vadd.f32 0.0, %v532
    %534 = vmatmul.f32.gmra.mxu0 %v284
    %v535 = vpop.f32.mrf.mxu0
    %v536 = vadd.f32 0.0, %v535
    %537 = vmatmul.f32.gmra.mxu0 %v287
    %v538 = vpop.f32.mrf.mxu0
    %v539 = vadd.f32 0.0, %v538
    %540 = vmatmul.f32.gmra.mxu0 %v290
    %v541 = vpop.f32.mrf.mxu0
    %v542 = vadd.f32 0.0, %v541
    %543 = vmatmul.f32.gmra.mxu0 %v293
    %v544 = vpop.f32.mrf.mxu0
    %v545 = vadd.f32 0.0, %v544
    %546 = vmatmul.f32.gmra.mxu0 %v296
    %v547 = vpop.f32.mrf.mxu0
    %v548 = vadd.f32 0.0, %v547
    %549 = vmatmul.f32.gmra.mxu0 %v299
    %v550 = vpop.f32.mrf.mxu0
    %v551 = vadd.f32 0.0, %v550
    %552 = vmatmul.f32.gmra.mxu0 %v302
    %v553 = vpop.f32.mrf.mxu0
    %v554 = vadd.f32 0.0, %v553
    %555 = vmatmul.f32.gmra.mxu0 %v305
    %v556 = vpop.f32.mrf.mxu0
    %v557 = vadd.f32 0.0, %v556
    %558 = vmatmul.f32.gmra.mxu0 %v308
    %v559 = vpop.f32.mrf.mxu0
    %v560 = vadd.f32 0.0, %v559
    %561 = vmatmul.f32.gmra.mxu0 %v483
    %v562 = vpop.f32.mrf.mxu0
    %v563 = vadd.f32 0.0, %v562
    %564 = vmatmul.f32.gmra.mxu0 %v486
    %v565 = vpop.f32.mrf.mxu0
    %v566 = vadd.f32 0.0, %v565
    %567 = vdwg.mxu0
    %v568 = vadd.f32 %v418, %v509
    %v569 = vadd.f32 %v421, %v512
    %v570 = vadd.f32 %v424, %v515
    %v571 = vadd.f32 %v427, %v518
    %v572 = vadd.f32 %v430, %v521
    %v573 = vadd.f32 %v433, %v524
    %v574 = vadd.f32 %v436, %v527
    %v575 = vadd.f32 %v439, %v530
    %v576 = vadd.f32 %v442, %v533
    %v577 = vadd.f32 %v445, %v536
    %v578 = vadd.f32 %v448, %v539
    %v579 = vadd.f32 %v451, %v542
    %v580 = vadd.f32 %v454, %v545
    %v581 = vadd.f32 %v457, %v548
    %v582 = vadd.f32 %v460, %v551
    %v583 = vadd.f32 %v463, %v554
    %v584 = vadd.f32 %v466, %v557
    %v585 = vadd.f32 %v469, %v560
    %v586 = vadd.f32 %v472, %v563
    %v587 = vadd.f32 %v475, %v566
    %s588 = scalar_lea.vmem [#allocation5], 96
    %v589 = vld [vmem:[%s588] sm:$0xff]
    %v590 = vld [vmem:[%s588 + $0x8] sm:$0xff]
    %v591 = vld [vmem:[%s588 + $0x10] sm:$0xff]
    %v592 = vld [vmem:[%s588 + $0x18] sm:$0x3f]
    %v594 = vsel %vm249, %v226, 0
    %v597 = vsel %vm249, %v227, 0
    %v600 = vsel %vm310, %v592, 0
    %602 = vmatpush.msra.mxu0 0.0
    %603 = vmatpush.msra.mxu0 0.0
    %604 = vmatpush.msra.mxu0 0.0
    %605 = vmatpush.msra.mxu0 0.0
    %606 = vmatpush.msra.mxu0 0.0
    %607 = vmatpush.msra.mxu0 0.0
    %608 = vmatpush.msra.mxu0 0.0
    %609 = vmatpush.msra.mxu0 0.0
    %610 = vmatpush.msra.mxu0 0.0
    %611 = vmatpush.msra.mxu0 0.0
    %612 = vmatpush.msra.mxu0 0.0
    %613 = vmatpush.msra.mxu0 0.0
    %614 = vmatpush.msra.mxu0 %v600
    %615 = vmatpush.msra.mxu0 %v591
    %616 = vmatpush.msra.mxu0 %v590
    %617 = vmatpush.msra.mxu0 %v589
    %618 = vmatmul.f32.gmra.mxu0 %v263
    %v619 = vpop.f32.mrf.mxu0
    %v620 = vadd.f32 0.0, %v619
    %621 = vmatmul.f32.gmra.mxu0 %v266
    %v622 = vpop.f32.mrf.mxu0
    %v623 = vadd.f32 0.0, %v622
    %624 = vmatmul.f32.gmra.mxu0 %v269
    %v625 = vpop.f32.mrf.mxu0
    %v626 = vadd.f32 0.0, %v625
    %627 = vmatmul.f32.gmra.mxu0 %v272
    %v628 = vpop.f32.mrf.mxu0
    %v629 = vadd.f32 0.0, %v628
    %630 = vmatmul.f32.gmra.mxu0 %v275
    %v631 = vpop.f32.mrf.mxu0
    %v632 = vadd.f32 0.0, %v631
    %633 = vmatmul.f32.gmra.mxu0 %v278
    %v634 = vpop.f32.mrf.mxu0
    %v635 = vadd.f32 0.0, %v634
    %636 = vmatmul.f32.gmra.mxu0 %v281
    %v637 = vpop.f32.mrf.mxu0
    %v638 = vadd.f32 0.0, %v637
    %639 = vmatmul.f32.gmra.mxu0 %v284
    %v640 = vpop.f32.mrf.mxu0
    %v641 = vadd.f32 0.0, %v640
    %642 = vmatmul.f32.gmra.mxu0 %v287
    %v643 = vpop.f32.mrf.mxu0
    %v644 = vadd.f32 0.0, %v643
    %645 = vmatmul.f32.gmra.mxu0 %v290
    %v646 = vpop.f32.mrf.mxu0
    %v647 = vadd.f32 0.0, %v646
    %648 = vmatmul.f32.gmra.mxu0 %v293
    %v649 = vpop.f32.mrf.mxu0
    %v650 = vadd.f32 0.0, %v649
    %651 = vmatmul.f32.gmra.mxu0 %v296
    %v652 = vpop.f32.mrf.mxu0
    %v653 = vadd.f32 0.0, %v652
    %654 = vmatmul.f32.gmra.mxu0 %v299
    %v655 = vpop.f32.mrf.mxu0
    %v656 = vadd.f32 0.0, %v655
    %657 = vmatmul.f32.gmra.mxu0 %v302
    %v658 = vpop.f32.mrf.mxu0
    %v659 = vadd.f32 0.0, %v658
    %660 = vmatmul.f32.gmra.mxu0 %v305
    %v661 = vpop.f32.mrf.mxu0
    %v662 = vadd.f32 0.0, %v661
    %663 = vmatmul.f32.gmra.mxu0 %v308
    %v664 = vpop.f32.mrf.mxu0
    %v665 = vadd.f32 0.0, %v664
    %666 = vmatmul.f32.gmra.mxu0 %v483
    %v667 = vpop.f32.mrf.mxu0
    %v668 = vadd.f32 0.0, %v667
    %669 = vmatmul.f32.gmra.mxu0 %v486
    %v670 = vpop.f32.mrf.mxu0
    %v671 = vadd.f32 0.0, %v670
    %672 = vmatmul.f32.gmra.mxu0 %v594
    %v673 = vpop.f32.mrf.mxu0
    %v674 = vadd.f32 0.0, %v673
    %675 = vmatmul.f32.gmra.mxu0 %v597
    %v676 = vpop.f32.mrf.mxu0
    %v677 = vadd.f32 0.0, %v676
    %678 = vdwg.mxu0
    %v679 = vadd.f32 %v568, %v620
    %v680 = vadd.f32 %v569, %v623
    %v681 = vadd.f32 %v570, %v626
    %v682 = vadd.f32 %v571, %v629
    %v683 = vadd.f32 %v572, %v632
    %v684 = vadd.f32 %v573, %v635
    %v685 = vadd.f32 %v574, %v638
    %v686 = vadd.f32 %v575, %v641
    %v687 = vadd.f32 %v576, %v644
    %v688 = vadd.f32 %v577, %v647
    %v689 = vadd.f32 %v578, %v650
    %v690 = vadd.f32 %v579, %v653
    %v691 = vadd.f32 %v580, %v656
    %v692 = vadd.f32 %v581, %v659
    %v693 = vadd.f32 %v582, %v662
    %v694 = vadd.f32 %v583, %v665
    %v695 = vadd.f32 %v584, %v668
    %v696 = vadd.f32 %v585, %v671
    %v697 = vadd.f32 %v586, %v674
    %v698 = vadd.f32 %v587, %v677
    %s699 = scalar_lea.vmem [#allocation5], 128
    %v700 = vld [vmem:[%s699] sm:$0xff]
    %v701 = vld [vmem:[%s699 + $0x8] sm:$0xff]
    %v702 = vld [vmem:[%s699 + $0x10] sm:$0xff]
    %v703 = vld [vmem:[%s699 + $0x18] sm:$0x3f]
    %v705 = vsel %vm249, %v238, 0
    %v708 = vsel %vm249, %v239, 0
    %v711 = vsel %vm310, %v703, 0
    %713 = vmatpush.msra.mxu0 0.0
    %714 = vmatpush.msra.mxu0 0.0
    %715 = vmatpush.msra.mxu0 0.0
    %716 = vmatpush.msra.mxu0 0.0
    %717 = vmatpush.msra.mxu0 0.0
    %718 = vmatpush.msra.mxu0 0.0
    %719 = vmatpush.msra.mxu0 0.0
    %720 = vmatpush.msra.mxu0 0.0
    %721 = vmatpush.msra.mxu0 0.0
    %722 = vmatpush.msra.mxu0 0.0
    %723 = vmatpush.msra.mxu0 0.0
    %724 = vmatpush.msra.mxu0 0.0
    %725 = vmatpush.msra.mxu0 %v711
    %726 = vmatpush.msra.mxu0 %v702
    %727 = vmatpush.msra.mxu0 %v701
    %728 = vmatpush.msra.mxu0 %v700
    %729 = vmatmul.f32.gmra.mxu0 %v269
    %v730 = vpop.f32.mrf.mxu0
    %v731 = vadd.f32 0.0, %v730
    %732 = vmatmul.f32.gmra.mxu0 %v272
    %v733 = vpop.f32.mrf.mxu0
    %v734 = vadd.f32 0.0, %v733
    %735 = vmatmul.f32.gmra.mxu0 %v275
    %v736 = vpop.f32.mrf.mxu0
    %v737 = vadd.f32 0.0, %v736
    %738 = vmatmul.f32.gmra.mxu0 %v278
    %v739 = vpop.f32.mrf.mxu0
    %v740 = vadd.f32 0.0, %v739
    %741 = vmatmul.f32.gmra.mxu0 %v281
    %v742 = vpop.f32.mrf.mxu0
    %v743 = vadd.f32 0.0, %v742
    %744 = vmatmul.f32.gmra.mxu0 %v284
    %v745 = vpop.f32.mrf.mxu0
    %v746 = vadd.f32 0.0, %v745
    %747 = vmatmul.f32.gmra.mxu0 %v287
    %v748 = vpop.f32.mrf.mxu0
    %v749 = vadd.f32 0.0, %v748
    %750 = vmatmul.f32.gmra.mxu0 %v290
    %v751 = vpop.f32.mrf.mxu0
    %v752 = vadd.f32 0.0, %v751
    %753 = vmatmul.f32.gmra.mxu0 %v293
    %v754 = vpop.f32.mrf.mxu0
    %v755 = vadd.f32 0.0, %v754
    %756 = vmatmul.f32.gmra.mxu0 %v296
    %v757 = vpop.f32.mrf.mxu0
    %v758 = vadd.f32 0.0, %v757
    %759 = vmatmul.f32.gmra.mxu0 %v299
    %v760 = vpop.f32.mrf.mxu0
    %v761 = vadd.f32 0.0, %v760
    %762 = vmatmul.f32.gmra.mxu0 %v302
    %v763 = vpop.f32.mrf.mxu0
    %v764 = vadd.f32 0.0, %v763
    %765 = vmatmul.f32.gmra.mxu0 %v305
    %v766 = vpop.f32.mrf.mxu0
    %v767 = vadd.f32 0.0, %v766
    %768 = vmatmul.f32.gmra.mxu0 %v308
    %v769 = vpop.f32.mrf.mxu0
    %v770 = vadd.f32 0.0, %v769
    %771 = vmatmul.f32.gmra.mxu0 %v483
    %v772 = vpop.f32.mrf.mxu0
    %v773 = vadd.f32 0.0, %v772
    %774 = vmatmul.f32.gmra.mxu0 %v486
    %v775 = vpop.f32.mrf.mxu0
    %v776 = vadd.f32 0.0, %v775
    %777 = vmatmul.f32.gmra.mxu0 %v594
    %v778 = vpop.f32.mrf.mxu0
    %v779 = vadd.f32 0.0, %v778
    %780 = vmatmul.f32.gmra.mxu0 %v597
    %v781 = vpop.f32.mrf.mxu0
    %v782 = vadd.f32 0.0, %v781
    %783 = vmatmul.f32.gmra.mxu0 %v705
    %v784 = vpop.f32.mrf.mxu0
    %v785 = vadd.f32 0.0, %v784
    %786 = vmatmul.f32.gmra.mxu0 %v708
    %v787 = vpop.f32.mrf.mxu0
    %v788 = vadd.f32 0.0, %v787
    %789 = vdwg.mxu0
    %v790 = vadd.f32 %v679, %v731
    %v791 = vadd.f32 %v680, %v734
    %v792 = vadd.f32 %v681, %v737
    %v793 = vadd.f32 %v682, %v740
    %v794 = vadd.f32 %v683, %v743
    %v795 = vadd.f32 %v684, %v746
    %v796 = vadd.f32 %v685, %v749
    %v797 = vadd.f32 %v686, %v752
    %v798 = vadd.f32 %v687, %v755
    %v799 = vadd.f32 %v688, %v758
    %v800 = vadd.f32 %v689, %v761
    %v801 = vadd.f32 %v690, %v764
    %v802 = vadd.f32 %v691, %v767
    %v803 = vadd.f32 %v692, %v770
    %v804 = vadd.f32 %v693, %v773
    %v805 = vadd.f32 %v694, %v776
    %v806 = vadd.f32 %v695, %v779
    %v807 = vadd.f32 %v696, %v782
    %v808 = vadd.f32 %v697, %v785
    %v809 = vadd.f32 %v698, %v788
    %v810 = vmax.f32 %v790, %v792
    %v811 = vmax.f32 %v791, %v793
    %v812 = vmax.f32 %v810, %v794
    %v813 = vmax.f32 %v811, %v795
    %v814 = vmax.f32 %v812, %v796
    %v815 = vmax.f32 %v813, %v797
    %v816 = vmax.f32 %v814, %v798
    %v817 = vmax.f32 %v815, %v799
    %v818 = vmax.f32 %v816, %v800
    %v819 = vmax.f32 %v817, %v801
    %v820 = vmax.f32 %v818, %v802
    %v821 = vmax.f32 %v819, %v803
    %v822 = vmax.f32 %v820, %v804
    %v823 = vmax.f32 %v821, %v805
    %v824 = vmax.f32 %v822, %v806
    %v825 = vmax.f32 %v823, %v807
    %v826 = vmax.f32 %v824, %v808
    %v827 = vmax.f32 %v825, %v809
    %v828 = vld [vmem:[%s2] sm:$0x1]
    %v830 = vperm.slane %v828, 0
    %v832 = vadd.f32 %v826, %v830
    %v833 = vadd.f32 %v827, %v830
    %v834 = vmax.f32 %v832, 0.0
    %v835 = vmax.f32 %v833, 0.0
    %v836 = vld [vmem:[#allocation7] sm:$0xff]
    %v837 = vld [vmem:[#allocation7 + $0x8] sm:$0xff]
    %v838 = vld [vmem:[#allocation7 + $0x10] sm:$0xff]
    %v839 = vld [vmem:[#allocation7 + $0x18] sm:$0xff]
    %v840 = vld [vmem:[#allocation7 + $0x20] sm:$0xff]
    %v841 = vld [vmem:[#allocation7 + $0x28] sm:$0xff]
    %v842 = vld [vmem:[#allocation7 + $0x30] sm:$0xff]
    %v843 = vld [vmem:[#allocation7 + $0x38] sm:$0xff]
    %v844 = vld [vmem:[%s4] sm:$0x1]
    %v846 = vperm.slane %v844, 0
    %vm848 = vcmask 523264
    %v850 = vsel %vm848, %v834, 0
    %v853 = vsel %vm848, %v835, 0
    %855 = vmatpush.msra.mxu0 0.0
    %856 = vmatpush.msra.mxu0 0.0
    %857 = vmatpush.msra.mxu0 0.0
    %858 = vmatpush.msra.mxu0 0.0
    %859 = vmatpush.msra.mxu0 0.0
    %860 = vmatpush.msra.mxu0 0.0
    %861 = vmatpush.msra.mxu0 0.0
    %862 = vmatpush.msra.mxu0 0.0
    %863 = vmatpush.msra.mxu0 %v843
    %864 = vmatpush.msra.mxu0 %v842
    %865 = vmatpush.msra.mxu0 %v841
    %866 = vmatpush.msra.mxu0 %v840
    %867 = vmatpush.msra.mxu0 %v839
    %868 = vmatpush.msra.mxu0 %v838
    %869 = vmatpush.msra.mxu0 %v837
    %870 = vmatpush.msra.mxu0 %v836
    %871 = vmatmul.f32.gmra.mxu0 %v850
    %v872 = vpop.f32.mrf.mxu0
    %v873 = vadd.f32 %v846, %v872
    %874 = vmatmul.f32.gmra.mxu0 %v853
    %v875 = vpop.f32.mrf.mxu0
    %v876 = vadd.f32 %v846, %v875
    %877 = vdwg.mxu0
    %v878 = vmax.f32 %v873, 0.0
    %v879 = vmax.f32 %v876, 0.0
    %v880 = vxor.u32 %v873, 2147483648
    %v881 = vxor.u32 %v876, 2147483648
    %v882 = vmul.f32 %v880, 1.442695
    %v883 = vpow.pop %v882
    %v884 = vmul.f32 %v881, 1.442695
    %v885 = vpow.pop %v884
    %v886 = vadd.f32 %v883, 1.0
    %v887 = vadd.f32 %v885, 1.0
    %v888 = vrcp.pop %v886
    %v889 = vmul.f32 %v886, %v888
    %v890 = vsub.f32 1.0, %v889
    %v891 = vmul.f32 %v888, %v890
    %v892 = vadd.f32 %v888, %v891
    %vm893 = vweird.f32 %v886
    %vm894 = vweird.f32 %v888
    %vm895 = vmor %vm893, %vm894
    %v896 = vsel %vm895, %v888, %v892
    %v897 = vand.u32 2147483647, %v886
    %vm898 = vcmp.eq.f32.partialorder %v897, 8.507059e+37
    %v899 = vand.u32 %v886, 2147483648
    %v900 = vor.u32 1.1754944e-38, %v899
    %v901 = vsel %vm898, %v900, %v896
    %v902 = vmul.f32 1.0, %v901
    %v903 = vrcp.pop %v887
    %v904 = vmul.f32 %v887, %v903
    %v905 = vsub.f32 1.0, %v904
    %v906 = vmul.f32 %v903, %v905
    %v907 = vadd.f32 %v903, %v906
    %vm908 = vweird.f32 %v887
    %vm909 = vweird.f32 %v903
    %vm910 = vmor %vm908, %vm909
    %v911 = vsel %vm910, %v903, %v907
    %v912 = vand.u32 2147483647, %v887
    %vm913 = vcmp.eq.f32.partialorder %v912, 8.507059e+37
    %v914 = vand.u32 %v887, 2147483648
    %v915 = vor.u32 1.1754944e-38, %v914
    %v916 = vsel %vm913, %v915, %v911
    %v917 = vmul.f32 1.0, %v916
    %920 = vrot.lane.b32.xlu0 %v878, 64
    %v921 = vpop.permute.xlu0 %920
    %922 = vrot.lane.b32.xlu0 %v879, 64
    %v923 = vpop.permute.xlu0 %922
    %v926 = vmul.f32 %v902, %v921
    %v927 = vmul.f32 %v917, %v923
    %v928 = vsub.f32 1.0, %v902
    %v929 = vsub.f32 1.0, %v917
    %930 = vrot.lane.b32.xlu0 %v834, 64
    %v931 = vpop.permute.xlu0 %930
    %932 = vrot.lane.b32.xlu0 %v835, 64
    %v933 = vpop.permute.xlu0 %932
    %v936 = vmul.f32 %v928, %v931
    %v937 = vmul.f32 %v929, %v933
    %v938 = vadd.f32 %v926, %v936
    %v939 = vadd.f32 %v927, %v937
    %942 = vrot.lane.b32.xlu0 %v938, 64
    %v943 = vpop.permute.xlu0 %942
    %944 = vrot.lane.b32.xlu0 %v939, 64
    %v945 = vpop.permute.xlu0 %944
    %v948 = vsel %vm848, %v943, 0.0
    %v949 = vsel %vm848, %v945, 0.0
    %950 = vst [vmem:[#allocation8] sm:$0xff] %v948
    %951 = vst [vmem:[#allocation8 + $0x8] sm:$0xff] %v949
    // Predicated region
    $region34: #{tpu_custom_call.1} parent=1 // pred_check
      _
    $region35: #{tpu_custom_call.1} parent=1 // pred_check_branch
      %953 = sbr.rel (0) target = $region37
    $region36: #{tpu_custom_call.1} parent=1 // pred_region
      %955 = vsyncadd [#allocation4], 0
      %s956 = sshll.u32 [#allocation8], 4
      %s957 = int_to_ptr.vmem [resolvable:$true] %s956
      %s958 = sshll.u32 %s5, 4
      %s959 = int_to_ptr.hbm [resolvable:$true] %s958
      %964 = dma.vmem_to_hbm [thread:$0]  %s957, 256, %s959, [#allocation4], 128, 128, 8
    $region37: #{tpu_custom_call.1} parent=1 // pred_fallthru
      _
    // Predicated region
    $region38: #{tpu_custom_call.1} parent=1 // pred_check
      _
    $region39: #{tpu_custom_call.1} parent=1 // pred_check_branch
      %966 = sbr.rel (0) target = $region41
    $region40: #{tpu_custom_call.1} parent=1 // pred_region
      %968 = dma.done [#allocation4], 256
    $region41: #{tpu_custom_call.1} parent=1 // pred_fallthru
      _
    %969 = vsyncpa [#allocation3], 1
    %970 = vsyncpa [#allocation6], 1
    %971 = vsyncpa [#allocation4], 1

</llo_original>
